<compile_context>
chip_gen: v6e
topology: v6e:2x2x1
jax: 0.10.0
libtpu: 0.0.40
codegen_flags: <defaults>
</compile_context>

<pallas_src>
import numpy as np
import jax
import jax.numpy as jnp
from jax import lax
from jax.experimental import pallas as pl
from jax.experimental.pallas import tpu as pltpu

_NEG_INF = -1e30
_VMEM_LIMIT = 48 * 1024 * 1024


def _round_up(a, m):
    return (a + m - 1) // m * m


def _pick_tile(n, target=512, step=8):
    """Largest row tile <= target (multiple of `step`) dividing n (n % 8 == 0)."""
    t = min(target, n)
    t -= t % step
    while n % t:
        t -= step
    return t


# ---------------------------------------------------------------------------
# Kernel 1: layer-0 input projection  gx0 = x @ W_ih0^T + (b_ih0 + b_hh0)
# One large tiled MXU matmul over all (time-major flattened) timesteps.
# ---------------------------------------------------------------------------
def _inproj_kernel(x_ref, w_ref, b_ref, o_ref):
    o_ref[...] = (
        jnp.dot(x_ref[...].astype(jnp.bfloat16), w_ref[...],
                preferred_element_type=jnp.float32)
        + b_ref[...]
    )


def input_projection(x_flat, w_t, bias, tile_rows):
    """x_flat: (N, Din) f32; w_t: (Din, 4Hp) bf16; bias: (1, 4Hp) f32."""
    N, Din = x_flat.shape
    G = w_t.shape[1]
    nblk = N // tile_rows
    return pl.pallas_call(
        _inproj_kernel,
        out_shape=jax.ShapeDtypeStruct((N, G), jnp.float32),
        grid_spec=pltpu.PrefetchScalarGridSpec(
            num_scalar_prefetch=0,
            grid=(nblk,),
            in_specs=[
                pl.BlockSpec((tile_rows, Din), lambda i: (i, 0)),
                pl.BlockSpec((Din, G), lambda i: (0, 0)),
                pl.BlockSpec((1, G), lambda i: (0, 0)),
            ],
            out_specs=pl.BlockSpec((tile_rows, G), lambda i: (i, 0)),
        ),
        compiler_params=pltpu.CompilerParams(
            dimension_semantics=("parallel",),
            vmem_limit_bytes=_VMEM_LIMIT,
        ),
    )(x_flat, w_t, bias)


# ---------------------------------------------------------------------------
# Kernel 2: fused multi-layer LSTM recurrence.
# Grid iterates sequentially over timestep blocks; per-layer h/c state and the
# inter-layer activation slab persist in VMEM scratch. Row index = t*B_pad + b.
# ---------------------------------------------------------------------------
def _encoder_kernel(gx0_ref, wih_r_ref, whh_ref, b_r_ref, y_ref,
                    h_sc, c_sc, xbuf, gxbuf):
    blk = pl.program_id(0)

    @pl.when(blk == 0)
    def _():
        h_sc[...] = jnp.zeros_like(h_sc)
        c_sc[...] = jnp.zeros_like(c_sc)

    L = whh_ref.shape[0]
    B = h_sc.shape[1]
    Hp = h_sc.shape[2]
    rows = xbuf.shape[0]
    Tb = rows // B

    def run_layer(l, gx_ref):
        w_hh = whh_ref[l]                     # (Hp, 4Hp) bf16, VMEM-resident

        def step(t, carry):
            h, c = carry
            r0 = pl.multiple_of(t * B, B)     # B is a multiple of 8 -> aligned
            g = gx_ref[pl.ds(r0, B), :] + jnp.dot(
                h.astype(jnp.bfloat16), w_hh, preferred_element_type=jnp.float32)
            # PyTorch gate order i, f, g, o; each gate block is Hp wide
            # (multiple of 128), so these slices are lane-aligned free views.
            i_g = jax.nn.sigmoid(g[:, 0:Hp])
            f_g = jax.nn.sigmoid(g[:, Hp:2 * Hp])
            g_g = jnp.tanh(g[:, 2 * Hp:3 * Hp])
            o_g = jax.nn.sigmoid(g[:, 3 * Hp:4 * Hp])
            c_new = f_g * c + i_g * g_g
            h_new = o_g * jnp.tanh(c_new)
            xbuf[pl.ds(r0, B), :] = h_new
            return h_new, c_new

        # Load h/c once, carry through the unrolled time loop, write back once.
        h, c = lax.fori_loop(0, Tb, step, (h_sc[l], c_sc[l]), unroll=True)
        h_sc[l] = h
        c_sc[l] = c

    # Layer 0: gate projections precomputed by the input-projection kernel.
    run_layer(0, gx0_ref)
    # Layers 1..L-1: one block-level input projection per layer, then recurrence.
    for l in range(1, L):
        gxbuf[...] = (jnp.dot(xbuf[...].astype(jnp.bfloat16), wih_r_ref[l - 1],
                              preferred_element_type=jnp.float32)
                      + b_r_ref[l - 1])
        run_layer(l, gxbuf)

    y_ref[...] = xbuf[...]                    # last layer's activation slab


def lstm_encoder(gx0_flat, w_ih_rest_t, w_hh_t_all, bias_rest, *, B, Tb):
    """gx0_flat: (N, 4Hp) f32; w_ih_rest_t: (max(L-1,1), Hp, 4Hp) bf16;
    w_hh_t_all: (L, Hp, 4Hp) bf16; bias_rest: (max(L-1,1), 1, 4Hp) f32."""
    N, G4 = gx0_flat.shape
    L, Hp, _ = w_hh_t_all.shape
    Lr = w_ih_rest_t.shape[0]
    rows = Tb * B
    nblk = N // rows
    # TODO(synk): single-buffer the grid-invariant weight specs
    # (pipeline_mode=pl.Buffered(1)) and shard the batch across the two v7x
    # TensorCores with a leading "parallel" grid axis once needed at scale.
    return pl.pallas_call(
        _encoder_kernel,
        out_shape=jax.ShapeDtypeStruct((N, Hp), jnp.float32),
        grid_spec=pltpu.PrefetchScalarGridSpec(
            num_scalar_prefetch=0,
            grid=(nblk,),
            in_specs=[
                pl.BlockSpec((rows, G4), lambda i: (i, 0)),
                pl.BlockSpec((Lr, Hp, G4), lambda i: (0, 0, 0)),
                pl.BlockSpec((L, Hp, G4), lambda i: (0, 0, 0)),
                pl.BlockSpec((Lr, 1, G4), lambda i: (0, 0, 0)),
            ],
            out_specs=pl.BlockSpec((rows, Hp), lambda i: (i, 0)),
            scratch_shapes=[
                pltpu.VMEM((L, B, Hp), jnp.float32),   # h state per layer
                pltpu.VMEM((L, B, Hp), jnp.float32),   # c state per layer
                pltpu.VMEM((rows, Hp), jnp.float32),   # inter-layer activations
                pltpu.VMEM((rows, G4), jnp.float32),   # per-layer gate projections
            ],
        ),
        compiler_params=pltpu.CompilerParams(
            dimension_semantics=("arbitrary",),        # time recurrence is serial
            vmem_limit_bytes=_VMEM_LIMIT,
        ),
    )(gx0_flat, w_ih_rest_t, w_hh_t_all, bias_rest)


# ---------------------------------------------------------------------------
# Kernel 3: decoder (SequenceLinear) + LogSoftmax. Lane-dense padded logits;
# padded-column masking is baked into the parameters (zero weight cols,
# -1e30 bias), so the kernel is a pure matmul + log-softmax.
# ---------------------------------------------------------------------------
def _decoder_kernel(x_ref, mask_ref, w_ref, b_ref, o_ref):
    x = (x_ref[...] * mask_ref[...]).astype(jnp.bfloat16)   # zero padded steps
    logits = (jnp.dot(x, w_ref[...], preferred_element_type=jnp.float32)
              + b_ref[...])
    m = jnp.max(logits, axis=-1, keepdims=True)
    lse = m + jnp.log(jnp.sum(jnp.exp(logits - m), axis=-1, keepdims=True))
    o_ref[...] = logits - lse


def decoder_logsoftmax(x_flat, mask_flat, w_t_pad, bias_pad, *, tile_n):
    """x_flat: (N, Hp) f32; mask_flat: (N, 1) f32; w_t_pad: (Hp, Opad) bf16."""
    N, Hp = x_flat.shape
    Opad = w_t_pad.shape[1]
    nblk = N // tile_n
    return pl.pallas_call(
        _decoder_kernel,
        out_shape=jax.ShapeDtypeStruct((N, Opad), jnp.float32),
        grid_spec=pltpu.PrefetchScalarGridSpec(
            num_scalar_prefetch=0,
            grid=(nblk,),
            in_specs=[
                pl.BlockSpec((tile_n, Hp), lambda i: (i, 0)),
                pl.BlockSpec((tile_n, 1), lambda i: (i, 0)),
                pl.BlockSpec((Hp, Opad), lambda i: (0, 0)),
                pl.BlockSpec((1, Opad), lambda i: (0, 0)),
            ],
            out_specs=pl.BlockSpec((tile_n, Opad), lambda i: (i, 0)),
        ),
        compiler_params=pltpu.CompilerParams(
            dimension_semantics=("parallel",),
            vmem_limit_bytes=_VMEM_LIMIT,
        ),
    )(x_flat, mask_flat, w_t_pad, bias_pad)


# ---------------------------------------------------------------------------
# Parameter construction (mirrors nn.LSTM / nn.Linear shapes).
# torch.nn.LSTM(isz, hsz, osz) -> num_layers == osz (= output_size + 1),
# reproducing the original module's constructor exactly. Hidden dim is padded
# to Hp = round_up(H, 128) with zeros; padded hidden units provably stay 0.
# ---------------------------------------------------------------------------
def init_params(key, input_size, output_size, hidden_size):
    osz = output_size + 1
    H = hidden_size
    Hp = _round_up(H, 128)
    L = osz
    k = 1.0 / np.sqrt(H)

    def gate_pad(w4h):
        """(..., 4H) -> (..., 4Hp): each PyTorch gate block (i,f,g,o) placed at
        a 128-aligned column offset g*Hp, zero-padded."""
        pad = [(0, 0)] * (w4h.ndim - 1) + [(0, Hp - H)]
        return jnp.concatenate(
            [jnp.pad(w4h[..., g * H:(g + 1) * H], pad) for g in range(4)],
            axis=-1)

    w_ih_rest, b_rest, w_hh_all = [], [], []
    w_ih0_t = None
    bias0 = None
    for layer in range(L):
        din = input_size if layer == 0 else H
        key, k1, k2, k3, k4 = jax.random.split(key, 5)
        w_ih = jax.random.uniform(k1, (4 * H, din), jnp.float32, -k, k)
        w_hh = jax.random.uniform(k2, (4 * H, H), jnp.float32, -k, k)
        b_ih = jax.random.uniform(k3, (4 * H,), jnp.float32, -k, k)
        b_hh = jax.random.uniform(k4, (4 * H,), jnp.float32, -k, k)

        bias_p = gate_pad((b_ih + b_hh)[None, :])                    # (1, 4Hp) f32
        w_hh_p = jnp.pad(gate_pad(w_hh.T), ((0, Hp - H), (0, 0)))    # (Hp, 4Hp)
        w_hh_all.append(w_hh_p.astype(jnp.bfloat16))
        if layer == 0:
            w_ih0_t = gate_pad(w_ih.T).astype(jnp.bfloat16)          # (isz, 4Hp)
            bias0 = bias_p
        else:
            w_ih_p = jnp.pad(gate_pad(w_ih.T), ((0, Hp - H), (0, 0)))
            w_ih_rest.append(w_ih_p.astype(jnp.bfloat16))            # (Hp, 4Hp)
            b_rest.append(bias_p)
    if w_ih_rest:
        w_ih_rest_t = jnp.stack(w_ih_rest)            # (L-1, Hp, 4Hp)
        bias_rest = jnp.stack(b_rest)                 # (L-1, 1, 4Hp)
    else:                                             # L == 1 edge case (dummy)
        w_ih_rest_t = jnp.zeros((1, Hp, 4 * Hp), jnp.bfloat16)
        bias_rest = jnp.zeros((1, 1, 4 * Hp), jnp.float32)
    w_hh_t_all = jnp.stack(w_hh_all)                  # (L, Hp, 4Hp)

    key, k1, k2 = jax.random.split(key, 3)
    w_dec = jax.random.uniform(k1, (osz, H), jnp.float32, -k, k)
    b_dec = jax.random.uniform(k2, (osz,), jnp.float32, -k, k)
    Opad = _round_up(osz, 128)                        # lane-dense decoder output
    dec_w_t_pad = (jnp.zeros((Hp, Opad), jnp.float32)
                   .at[:H, :osz].set(w_dec.T).astype(jnp.bfloat16))
    # Padded logit columns are killed by a baked-in -1e30 bias (no in-kernel mask).
    dec_b_pad = jnp.full((1, Opad), _NEG_INF, jnp.float32).at[0, :osz].set(b_dec)

    return {
        "isz": input_size, "hsz": H, "hsz_pad": Hp, "osz": osz,
        "w_ih0_t": w_ih0_t, "bias0": bias0,
        "w_ih_rest_t": w_ih_rest_t, "bias_rest": bias_rest,
        "w_hh_t_all": w_hh_t_all,
        "dec_w_t_pad": dec_w_t_pad, "dec_b_pad": dec_b_pad,
    }


# ---------------------------------------------------------------------------
# Forward pass (CTClstmp.forward).
# ---------------------------------------------------------------------------
def ctclstmp_forward(params, sequences, sequence_lengths, Tb=32):
    """sequences: (B, T, isz) f32; sequence_lengths: numpy int array (B,),
    sorted descending (pack_padded_sequence enforce_sorted=True)."""
    B, T, isz = sequences.shape
    Hp, osz = params["hsz_pad"], params["osz"]
    lengths = np.asarray(sequence_lengths)
    t_max = int(lengths.max())

    # Static padding: batch -> multiple of 8 sublanes, time -> multiple of the
    # timestep block. Lengths only drive masks / the final slice (no recompiles).
    B_pad = _round_up(B, 8)
    Tb = min(Tb, _round_up(T, 8))
    T_pad = _round_up(T, Tb)
    x_tm = jnp.transpose(sequences, (1, 0, 2))                 # (T, B, isz)
    x_tm = jnp.pad(x_tm, ((0, T_pad - T), (0, B_pad - B), (0, 0)))
    N = T_pad * B_pad                                          # multiple of 8
    tile = _pick_tile(N)                                       # 512-row target

    # 1) Hoisted layer-0 input projection: one big tiled MXU matmul.
    gx0_flat = input_projection(x_tm.reshape(N, isz),
                                params["w_ih0_t"], params["bias0"],
                                tile_rows=tile)                # (N, 4Hp)

    # 2) Fused multi-layer LSTM recurrence (single pallas_call).
    enc_flat = lstm_encoder(gx0_flat, params["w_ih_rest_t"],
                            params["w_hh_t_all"], params["bias_rest"],
                            B=B_pad, Tb=Tb)                    # (N, Hp)

    # 3) Zero padded timesteps (pad_packed_sequence zero-fill), then decoder +
    #    log-softmax over lane-dense padded logits.
    len_pad = np.pad(lengths, (0, B_pad - B))                  # pad rows: len 0
    mask_tm = (np.arange(T_pad)[:, None] < len_pad[None, :]).astype(np.float32)
    mask_flat = jnp.asarray(mask_tm.reshape(N, 1))
    out_flat = decoder_logsoftmax(enc_flat, mask_flat,
                                  params["dec_w_t_pad"], params["dec_b_pad"],
                                  tile_n=tile)                 # (N, Opad)

    out = out_flat.reshape(T_pad, B_pad, -1)[:t_max, :B, :osz]
    return jnp.transpose(out, (1, 0, 2))                       # (B, t_max, osz)


# ---------------------------------------------------------------------------
# Pure-JAX reference (no Pallas) for validation; uses the same (padded, bf16)
# parameters upcast to f32.
# ---------------------------------------------------------------------------
def reference_forward(params, sequences, sequence_lengths):
    B, T, _ = sequences.shape
    Hp, osz = params["hsz_pad"], params["osz"]
    L = osz
    lengths = np.asarray(sequence_lengths)
    t_max = int(lengths.max())
    layer_in = jnp.asarray(sequences, jnp.float32)
    for l in range(L):
        if l == 0:
            w_ih_t = params["w_ih0_t"].astype(jnp.float32)
            bias = params["bias0"]
        else:
            w_ih_t = params["w_ih_rest_t"][l - 1].astype(jnp.float32)
            bias = params["bias_rest"][l - 1]
        w_hh_t = params["w_hh_t_all"][l].astype(jnp.float32)
        h = jnp.zeros((B, Hp), jnp.float32)
        c = jnp.zeros((B, Hp), jnp.float32)
        outs = []
        for t in range(T):
            g = layer_in[:, t, :] @ w_ih_t + h @ w_hh_t + bias
            i_g = jax.nn.sigmoid(g[:, 0:Hp])
            f_g = jax.nn.sigmoid(g[:, Hp:2 * Hp])
            g_g = jnp.tanh(g[:, 2 * Hp:3 * Hp])
            o_g = jax.nn.sigmoid(g[:, 3 * Hp:4 * Hp])
            c = f_g * c + i_g * g_g
            h = o_g * jnp.tanh(c)
            outs.append(h)
        layer_in = jnp.stack(outs, axis=1)            # (B, T, Hp)
    enc = layer_in[:, :t_max, :]
    mask = jnp.asarray(
        (np.arange(t_max)[None, :] < lengths[:, None]).astype(np.float32))[..., None]
    enc = enc * mask
    w = params["dec_w_t_pad"].astype(jnp.float32)[:, :osz]
    b = params["dec_b_pad"][0, :osz]
    logits = enc @ w + b
    return jax.nn.log_softmax(logits, axis=-1)


if __name__ == "__main__":
    # Small, module-consistent shapes.
    B, T = 2, 8
    input_size, output_size, hidden_size, nlayers = 16, 4, 32, 2
    # (nlayers is stored but unused by the original module's LSTM construction.)

    key = jax.random.PRNGKey(0)
    key, kp, kx = jax.random.split(key, 3)
    params = init_params(kp, input_size, output_size, hidden_size)

    sequences = jax.random.normal(kx, (B, T, input_size), jnp.float32)
    sequence_lengths = np.array([8, 5], dtype=np.int64)   # descending, as required

    out = jax.block_until_ready(ctclstmp_forward(params, sequences, sequence_lengths))

    assert out.shape == (B, int(sequence_lengths.max()), output_size + 1)
    assert bool(jnp.all(jnp.isfinite(out)))
    # log-softmax rows sum to 1 in prob space
    assert bool(jnp.allclose(jnp.sum(jnp.exp(out), axis=-1), 1.0, atol=1e-5))
    # match the pure-JAX reference (bf16 MXU operands, f32 accumulation)
    ref = jax.block_until_ready(reference_forward(params, sequences, sequence_lengths))
    assert bool(jnp.allclose(out, ref, atol=5e-2, rtol=5e-2)), \
        float(jnp.max(jnp.abs(out - ref)))
    print("KERNEL_OK")
</pallas_src>

<mosaic_0001>
module attributes {stable_mosaic.version = 11 : i64} {
  func.func @_inproj_kernel(%arg0: i32, %arg1: memref<64x16xf32, #tpu.memory_space<vmem>>, %arg2: memref<16x512xbf16, #tpu.memory_space<vmem>>, %arg3: memref<1x512xf32, #tpu.memory_space<vmem>>, %arg4: memref<64x512xf32, #tpu.memory_space<vmem>>) attributes {dimension_semantics = [#tpu.dimension_semantics<parallel>], iteration_bounds = array<i64: 1>, scalar_prefetch = 0 : i64, scratch_operands = 0 : i64, tpu.core_type = #tpu.core_type<tc>, window_params = [{transform_indices = @transform_0, window_bounds = array<i64: 64, 16>}, {pipeline_mode = #tpu.pipeline_mode<synchronous>, transform_indices = @transform_1, window_bounds = array<i64: 16, 512>}, {pipeline_mode = #tpu.pipeline_mode<synchronous>, transform_indices = @transform_2, window_bounds = array<i64: 1, 512>}, {transform_indices = @transform_3, window_bounds = array<i64: 64, 512>}]} {
    %c0 = arith.constant 0 : index
    %c0_0 = arith.constant 0 : index
    %0 = vector.load %arg1[%c0, %c0_0] : memref<64x16xf32, #tpu.memory_space<vmem>>, vector<64x16xf32>
    %1 = arith.truncf %0 : vector<64x16xf32> to vector<64x16xbf16>
    %c0_1 = arith.constant 0 : index
    %c0_2 = arith.constant 0 : index
    %2 = vector.load %arg2[%c0_1, %c0_2] : memref<16x512xbf16, #tpu.memory_space<vmem>>, vector<16x512xbf16>
    %cst = arith.constant dense<0.000000e+00> : vector<64x512xf32>
    %3 = tpu.matmul %1, %2, %cst {dimension_numbers = #tpu.dot_dimension_numbers<[1], [0], [0], [1], [0, 0, 1, 1], [], []>} : vector<64x16xbf16>, vector<16x512xbf16>, vector<64x512xf32> -> vector<64x512xf32>
    %c0_3 = arith.constant 0 : index
    %c0_4 = arith.constant 0 : index
    %4 = vector.load %arg3[%c0_3, %c0_4] : memref<1x512xf32, #tpu.memory_space<vmem>>, vector<1x512xf32>
    %5 = vector.broadcast %4 : vector<1x512xf32> to vector<64x512xf32>
    %6 = arith.addf %3, %5 : vector<64x512xf32>
    %c0_5 = arith.constant 0 : index
    %c0_6 = arith.constant 0 : index
    %7 = vector.load %arg4[%c0_5, %c0_6] : memref<64x512xf32, #tpu.memory_space<vmem>>, vector<64x512xf32>
    tpu.vector_store %arg4[%c0_5, %c0_6], %6 {strides = array<i32>} : memref<64x512xf32, #tpu.memory_space<vmem>>, vector<64x512xf32>,
    return
  }
  func.func @transform_0(%arg0: i32) -> (i32, i32) {
    %c0_i32 = arith.constant 0 : i32
    %c0_i32_0 = arith.constant 0 : i32
    return %arg0, %c0_i32 : i32, i32
  }
  func.func @transform_1(%arg0: i32) -> (i32, i32) {
    %c0_i32 = arith.constant 0 : i32
    %c0_i32_0 = arith.constant 0 : i32
    %c0_i32_1 = arith.constant 0 : i32
    return %c0_i32, %c0_i32_0 : i32, i32
  }
  func.func @transform_2(%arg0: i32) -> (i32, i32) {
    %c0_i32 = arith.constant 0 : i32
    %c0_i32_0 = arith.constant 0 : i32
    %c0_i32_1 = arith.constant 0 : i32
    return %c0_i32, %c0_i32_0 : i32, i32
  }
  func.func @transform_3(%arg0: i32) -> (i32, i32) {
    %c0_i32 = arith.constant 0 : i32
    %c0_i32_0 = arith.constant 0 : i32
    return %arg0, %c0_i32 : i32, i32
  }
}

</mosaic_0001>

<llo_original>
// kernel: tpu_custom_call.1
$region0: #{tpu_custom_call.1}
  #allocation0 [shape = 'u32[]', space=smem, size = 0x4, offset = 0x4, fixed_abs, tag = 'smem constant byte address 0x4 - core index']
  #allocation1 [shape = 'u32[144,128]{1,0:T(1,128)}', space=vmem, size = 0x12000, scoped, tag = 'internal scratch']
  %s0 = inlined_call_operand.vmem [shape: f32[64,16], index: 0, kind: input, shape index: {}]
  %s1 = inlined_call_operand.vmem [shape: bf16[16,512], index: 1, kind: input, shape index: {}]
  %s2 = inlined_call_operand.vmem [shape: f32[1,512], index: 2, kind: input, shape index: {}]
  %s3 = inlined_call_operand.hbm [shape: f32[64,512], index: 3, kind: output, shape index: {}]
  %s4 = sld [smem:[#allocation0]]
  $region22: #{tpu_custom_call.1} parent=0
    _
  %s6 = ssub.s32 1, %s4
  %s7 = scalar_select 0, %s6, %s4
  $region1: #{tpu_custom_call.1} parent=0
    #allocation2 [shape = 'u8[131072]{0}', space=vmem, size = 0x20000, scoped, tag = 'output window, operand 0, single buffered']
    #allocation3 [shape = 's32[1]{0}', space=sflag, size = 0x4, scoped, tag = 'scoped memory for tpu_custom_call.1']
    %8 = vsyncpa [#allocation3], 0
    // Predicated region
    $region2: #{tpu_custom_call.1} parent=1 // pred_check
      _
    $region3: #{tpu_custom_call.1} parent=1 // pred_check_branch
      %10 = sbr.rel (0) target = $region5
    $region4: #{tpu_custom_call.1} parent=1 // pred_region
      _
    $region5: #{tpu_custom_call.1} parent=1 // pred_fallthru
      _
    // Predicated region
    $region6: #{tpu_custom_call.1} parent=1 // pred_check
      _
    $region7: #{tpu_custom_call.1} parent=1 // pred_check_branch
      %12 = sbr.rel (0) target = $region9
    $region8: #{tpu_custom_call.1} parent=1 // pred_region
      _
    $region9: #{tpu_custom_call.1} parent=1 // pred_fallthru
      _
    // Predicated region
    $region10: #{tpu_custom_call.1} parent=1 // pred_check
      _
    $region11: #{tpu_custom_call.1} parent=1 // pred_check_branch
      %14 = sbr.rel (0) target = $region13
    $region12: #{tpu_custom_call.1} parent=1 // pred_region
      _
    $region13: #{tpu_custom_call.1} parent=1 // pred_fallthru
      _
    %v16 = vld [vmem:[%s0] sm:$0xff]
    %v17 = vld [vmem:[%s0 + $0x8] sm:$0xff]
    %v18 = vld [vmem:[%s0 + $0x10] sm:$0xff]
    %v19 = vld [vmem:[%s0 + $0x18] sm:$0xff]
    %v20 = vld [vmem:[%s0 + $0x20] sm:$0xff]
    %v21 = vld [vmem:[%s0 + $0x28] sm:$0xff]
    %v22 = vld [vmem:[%s0 + $0x30] sm:$0xff]
    %v23 = vld [vmem:[%s0 + $0x38] sm:$0xff]
    %v24 = vpack.c.bf16 %v17, %v16
    %v25 = vpack.c.bf16 %v19, %v18
    %v26 = vpack.c.bf16 %v21, %v20
    %v27 = vpack.c.bf16 %v23, %v22
    %v28 = vld [vmem:[%s1] sm:$0xff]
    %v29 = vld [vmem:[%s1 + $0x8] sm:$0xff]
    %v30 = vld [vmem:[%s1 + $0x10] sm:$0xff]
    %v31 = vld [vmem:[%s1 + $0x18] sm:$0xff]
    %v32 = vld [vmem:[%s2] sm:$0xf]
    %v34 = vlaneseq
    %v35 = vshrl.u32 %v34, 7
    %v36 = vsub.s32 0, %v35
    %v37 = vrot.slane %v32, %v36
    %v38 = vlaneseq
    %v39 = vshrl.u32 %v38, 7
    %v40 = vsub.s32 1, %v39
    %v41 = vrot.slane %v32, %v40
    %v42 = vlaneseq
    %v43 = vshrl.u32 %v42, 7
    %v44 = vsub.s32 2, %v43
    %v45 = vrot.slane %v32, %v44
    %v46 = vlaneseq
    %v47 = vshrl.u32 %v46, 7
    %v48 = vsub.s32 3, %v47
    %v49 = vrot.slane %v32, %v48
    %v58 = vunpack.c.l.b16 %v28
    %v59 = vunpack.c.h.b16 %v28
    %v60 = vunpack.c.l.b16 %v29
    %v61 = vunpack.c.h.b16 %v29
    %v62 = vunpack.c.l.b16 %v30
    %v63 = vunpack.c.h.b16 %v30
    %v64 = vunpack.c.l.b16 %v31
    %v65 = vunpack.c.h.b16 %v31
    %v66 = vpack.c.b16 %v62, %v58
    %v67 = vpack.c.b16 %v63, %v59
    %v68 = vpack.c.b16 %v64, %v60
    %v69 = vpack.c.b16 %v65, %v61
    %vm74 = vcmask 130048
    %v76 = vsel %vm74, %v24, 0
    %v79 = vsel %vm74, %v25, 0
    %v82 = vsel %vm74, %v26, 0
    %v85 = vsel %vm74, %v27, 0
    %87 = vmatprep.subr.bf16.mxu0 0
    %88 = vmatpush1.bf16.msra.mxu0 0
    %89 = vmatprep.subr.bf16.mxu0 0
    %90 = vmatpush1.bf16.msra.mxu0 0
    %91 = vmatprep.subr.bf16.mxu0 0
    %92 = vmatpush1.bf16.msra.mxu0 0
    %93 = vmatprep.subr.bf16.mxu0 0
    %94 = vmatpush1.bf16.msra.mxu0 0
    %95 = vmatprep.subr.bf16.mxu0 0
    %96 = vmatpush1.bf16.msra.mxu0 0
    %97 = vmatprep.subr.bf16.mxu0 0
    %98 = vmatpush1.bf16.msra.mxu0 0
    %99 = vmatprep.subr.bf16.mxu0 0
    %100 = vmatpush1.bf16.msra.mxu0 0
    %101 = vmatprep.subr.bf16.mxu0 %v67
    %102 = vmatpush1.bf16.msra.mxu0 %v66
    %103 = vmatprep.subr.bf16.mxu0 0
    %104 = vmatpush2.bf16.msra.mxu0 0
    %105 = vmatprep.subr.bf16.mxu0 0
    %106 = vmatpush2.bf16.msra.mxu0 0
    %107 = vmatprep.subr.bf16.mxu0 0
    %108 = vmatpush2.bf16.msra.mxu0 0
    %109 = vmatprep.subr.bf16.mxu0 0
    %110 = vmatpush2.bf16.msra.mxu0 0
    %111 = vmatprep.subr.bf16.mxu0 0
    %112 = vmatpush2.bf16.msra.mxu0 0
    %113 = vmatprep.subr.bf16.mxu0 0
    %114 = vmatpush2.bf16.msra.mxu0 0
    %115 = vmatprep.subr.bf16.mxu0 0
    %116 = vmatpush2.bf16.msra.mxu0 0
    %117 = vmatprep.subr.bf16.mxu0 0
    %118 = vmatpush2.bf16.msra.mxu0 0
    %119 = vmatprep.mubr.bf16.mxu0 0
    %120 = vmatmul.mubr.bf16.gmra.mxu0 %v76
    %v121 = vpop.f32.mrf.mxu0
    %v122 = vadd.f32 %v37, %v121
    %v123 = vpop.f32.mrf.mxu0
    %v124 = vadd.f32 %v41, %v123
    %v125 = vpop.f32.mrf.mxu0
    %v126 = vadd.f32 %v37, %v125
    %v127 = vpop.f32.mrf.mxu0
    %v128 = vadd.f32 %v41, %v127
    %129 = vmatprep.mubr.bf16.mxu0 0
    %130 = vmatmul.mubr.bf16.gmra.mxu0 %v79
    %v131 = vpop.f32.mrf.mxu0
    %v132 = vadd.f32 %v37, %v131
    %v133 = vpop.f32.mrf.mxu0
    %v134 = vadd.f32 %v41, %v133
    %v135 = vpop.f32.mrf.mxu0
    %v136 = vadd.f32 %v37, %v135
    %v137 = vpop.f32.mrf.mxu0
    %v138 = vadd.f32 %v41, %v137
    %139 = vmatprep.mubr.bf16.mxu0 0
    %140 = vmatmul.mubr.bf16.gmra.mxu0 %v82
    %v141 = vpop.f32.mrf.mxu0
    %v142 = vadd.f32 %v37, %v141
    %v143 = vpop.f32.mrf.mxu0
    %v144 = vadd.f32 %v41, %v143
    %v145 = vpop.f32.mrf.mxu0
    %v146 = vadd.f32 %v37, %v145
    %v147 = vpop.f32.mrf.mxu0
    %v148 = vadd.f32 %v41, %v147
    %149 = vmatprep.mubr.bf16.mxu0 0
    %150 = vmatmul.mubr.bf16.gmra.mxu0 %v85
    %v151 = vpop.f32.mrf.mxu0
    %v152 = vadd.f32 %v37, %v151
    %v153 = vpop.f32.mrf.mxu0
    %v154 = vadd.f32 %v41, %v153
    %v155 = vpop.f32.mrf.mxu0
    %v156 = vadd.f32 %v37, %v155
    %v157 = vpop.f32.mrf.mxu0
    %v158 = vadd.f32 %v41, %v157
    %159 = vdwg.mxu0
    %160 = vmatprep.subr.bf16.mxu0 0
    %161 = vmatpush1.bf16.msra.mxu0 0
    %162 = vmatprep.subr.bf16.mxu0 0
    %163 = vmatpush1.bf16.msra.mxu0 0
    %164 = vmatprep.subr.bf16.mxu0 0
    %165 = vmatpush1.bf16.msra.mxu0 0
    %166 = vmatprep.subr.bf16.mxu0 0
    %167 = vmatpush1.bf16.msra.mxu0 0
    %168 = vmatprep.subr.bf16.mxu0 0
    %169 = vmatpush1.bf16.msra.mxu0 0
    %170 = vmatprep.subr.bf16.mxu0 0
    %171 = vmatpush1.bf16.msra.mxu0 0
    %172 = vmatprep.subr.bf16.mxu0 0
    %173 = vmatpush1.bf16.msra.mxu0 0
    %174 = vmatprep.subr.bf16.mxu0 %v69
    %175 = vmatpush1.bf16.msra.mxu0 %v68
    %176 = vmatprep.subr.bf16.mxu0 0
    %177 = vmatpush2.bf16.msra.mxu0 0
    %178 = vmatprep.subr.bf16.mxu0 0
    %179 = vmatpush2.bf16.msra.mxu0 0
    %180 = vmatprep.subr.bf16.mxu0 0
    %181 = vmatpush2.bf16.msra.mxu0 0
    %182 = vmatprep.subr.bf16.mxu0 0
    %183 = vmatpush2.bf16.msra.mxu0 0
    %184 = vmatprep.subr.bf16.mxu0 0
    %185 = vmatpush2.bf16.msra.mxu0 0
    %186 = vmatprep.subr.bf16.mxu0 0
    %187 = vmatpush2.bf16.msra.mxu0 0
    %188 = vmatprep.subr.bf16.mxu0 0
    %189 = vmatpush2.bf16.msra.mxu0 0
    %190 = vmatprep.subr.bf16.mxu0 0
    %191 = vmatpush2.bf16.msra.mxu0 0
    %192 = vmatprep.mubr.bf16.mxu0 0
    %193 = vmatmul.mubr.bf16.gmra.mxu0 %v76
    %v194 = vpop.f32.mrf.mxu0
    %v195 = vadd.f32 %v45, %v194
    %v196 = vpop.f32.mrf.mxu0
    %v197 = vadd.f32 %v49, %v196
    %v198 = vpop.f32.mrf.mxu0
    %v199 = vadd.f32 %v45, %v198
    %v200 = vpop.f32.mrf.mxu0
    %v201 = vadd.f32 %v49, %v200
    %202 = vmatprep.mubr.bf16.mxu0 0
    %203 = vmatmul.mubr.bf16.gmra.mxu0 %v79
    %v204 = vpop.f32.mrf.mxu0
    %v205 = vadd.f32 %v45, %v204
    %v206 = vpop.f32.mrf.mxu0
    %v207 = vadd.f32 %v49, %v206
    %v208 = vpop.f32.mrf.mxu0
    %v209 = vadd.f32 %v45, %v208
    %v210 = vpop.f32.mrf.mxu0
    %v211 = vadd.f32 %v49, %v210
    %212 = vmatprep.mubr.bf16.mxu0 0
    %213 = vmatmul.mubr.bf16.gmra.mxu0 %v82
    %v214 = vpop.f32.mrf.mxu0
    %v215 = vadd.f32 %v45, %v214
    %v216 = vpop.f32.mrf.mxu0
    %v217 = vadd.f32 %v49, %v216
    %v218 = vpop.f32.mrf.mxu0
    %v219 = vadd.f32 %v45, %v218
    %v220 = vpop.f32.mrf.mxu0
    %v221 = vadd.f32 %v49, %v220
    %222 = vmatprep.mubr.bf16.mxu0 0
    %223 = vmatmul.mubr.bf16.gmra.mxu0 %v85
    %v224 = vpop.f32.mrf.mxu0
    %v225 = vadd.f32 %v45, %v224
    %v226 = vpop.f32.mrf.mxu0
    %v227 = vadd.f32 %v49, %v226
    %v228 = vpop.f32.mrf.mxu0
    %v229 = vadd.f32 %v45, %v228
    %v230 = vpop.f32.mrf.mxu0
    %v231 = vadd.f32 %v49, %v230
    %232 = vdwg.mxu0
    %233 = vst [vmem:[#allocation2] sm:$0xff] %v122
    %234 = vst [vmem:[#allocation2 + $0x8] sm:$0xff] %v124
    %235 = vst [vmem:[#allocation2 + $0x10] sm:$0xff] %v195
    %236 = vst [vmem:[#allocation2 + $0x18] sm:$0xff] %v197
    %237 = vst [vmem:[#allocation2 + $0x20] sm:$0xff] %v126
    %238 = vst [vmem:[#allocation2 + $0x28] sm:$0xff] %v128
    %239 = vst [vmem:[#allocation2 + $0x30] sm:$0xff] %v199
    %240 = vst [vmem:[#allocation2 + $0x38] sm:$0xff] %v201
    %241 = vst [vmem:[#allocation2 + $0x40] sm:$0xff] %v132
    %242 = vst [vmem:[#allocation2 + $0x48] sm:$0xff] %v134
    %243 = vst [vmem:[#allocation2 + $0x50] sm:$0xff] %v205
    %244 = vst [vmem:[#allocation2 + $0x58] sm:$0xff] %v207
    %245 = vst [vmem:[#allocation2 + $0x60] sm:$0xff] %v136
    %246 = vst [vmem:[#allocation2 + $0x68] sm:$0xff] %v138
    %247 = vst [vmem:[#allocation2 + $0x70] sm:$0xff] %v209
    %248 = vst [vmem:[#allocation2 + $0x78] sm:$0xff] %v211
    %249 = vst [vmem:[#allocation2 + $0x80] sm:$0xff] %v142
    %250 = vst [vmem:[#allocation2 + $0x88] sm:$0xff] %v144
    %251 = vst [vmem:[#allocation2 + $0x90] sm:$0xff] %v215
    %252 = vst [vmem:[#allocation2 + $0x98] sm:$0xff] %v217
    %253 = vst [vmem:[#allocation2 + $0xa0] sm:$0xff] %v146
    %254 = vst [vmem:[#allocation2 + $0xa8] sm:$0xff] %v148
    %255 = vst [vmem:[#allocation2 + $0xb0] sm:$0xff] %v219
    %256 = vst [vmem:[#allocation2 + $0xb8] sm:$0xff] %v221
    %257 = vst [vmem:[#allocation2 + $0xc0] sm:$0xff] %v152
    %258 = vst [vmem:[#allocation2 + $0xc8] sm:$0xff] %v154
    %259 = vst [vmem:[#allocation2 + $0xd0] sm:$0xff] %v225
    %260 = vst [vmem:[#allocation2 + $0xd8] sm:$0xff] %v227
    %261 = vst [vmem:[#allocation2 + $0xe0] sm:$0xff] %v156
    %262 = vst [vmem:[#allocation2 + $0xe8] sm:$0xff] %v158
    %263 = vst [vmem:[#allocation2 + $0xf0] sm:$0xff] %v229
    %264 = vst [vmem:[#allocation2 + $0xf8] sm:$0xff] %v231
    // Predicated region
    $region14: #{tpu_custom_call.1} parent=1 // pred_check
      _
    $region15: #{tpu_custom_call.1} parent=1 // pred_check_branch
      %266 = sbr.rel (0) target = $region17
    $region16: #{tpu_custom_call.1} parent=1 // pred_region
      %s268 = ssub.s32 4096, 4096
      %269 = vsyncadd [#allocation3], %s268
      %s270 = sshll.u32 [#allocation2], 4
      %s271 = int_to_ptr.vmem [resolvable:$true] %s270
      %276 = dma.vmem_to_hbm [thread:$0]  %s271, 4096, %s3, [#allocation3], 512, 512, 32
    $region17: #{tpu_custom_call.1} parent=1 // pred_fallthru
      _
    // Predicated region
    $region18: #{tpu_custom_call.1} parent=1 // pred_check
      _
    $region19: #{tpu_custom_call.1} parent=1 // pred_check_branch
      %278 = sbr.rel (0) target = $region21
    $region20: #{tpu_custom_call.1} parent=1 // pred_region
      %279 = dma.done [#allocation3], 4096
    $region21: #{tpu_custom_call.1} parent=1 // pred_fallthru
      _
    %280 = vsyncpa [#allocation3], 1

</llo_original>
